<compile_context>
chip_gen: v6e
topology: v6e:2x2x1
jax: 0.10.0
libtpu: 0.0.40
codegen_flags: <defaults>
</compile_context>

<pallas_src>
import functools

import numpy as np
import jax
import jax.numpy as jnp
from jax import lax
from jax.experimental import pallas as pl
from jax.experimental.pallas import tpu as pltpu

TM = 256                      # max row tile of the generic matmul kernel
VMEM_LIMIT = 64 * 1024 * 1024  # explicit scoped-VMEM limit (v5e default is 16 MiB)


# ----------------------------------------------------------------------------
# Generic matmul (+BN +ReLU [+residual]) kernel
# ----------------------------------------------------------------------------
def _matmul_bn_act_kernel(*refs, relu, has_res):
    """o = act((a @ b) * scale + bias [+ residual]) for one (tm, N) row tile."""
    if has_res:
        a_ref, b_ref, s_ref, c_ref, r_ref, o_ref = refs
    else:
        a_ref, b_ref, s_ref, c_ref, o_ref = refs
        r_ref = None
    acc = jnp.dot(a_ref[...], b_ref[...], preferred_element_type=jnp.float32)
    acc = acc * s_ref[...] + c_ref[...]
    if r_ref is not None:
        acc = acc + r_ref[...].astype(jnp.float32)   # residual streamed as bf16
    if relu:
        acc = jnp.maximum(acc, 0.0)
    o_ref[...] = acc.astype(o_ref.dtype)


def matmul_bn_act(a, b, scale=None, bias=None, relu=False, residual=None,
                  out_dtype=jnp.bfloat16):
    """o = act((a @ b) * scale + bias [+ residual]); a:[M,K], b:[K,N].

    bf16 operands / bf16 output (f32 accumulation).  Grid uses cdiv and Pallas
    masks writes of any ragged final row block; nothing reduces across rows in
    the epilogue so garbage rows of the masked tile never reach the output.
    """
    a = jnp.asarray(a).astype(jnp.bfloat16)
    b = jnp.asarray(b).astype(jnp.bfloat16)
    M, K = a.shape
    K2, N = b.shape
    assert K == K2
    if scale is None:
        scale = jnp.ones((N,), jnp.float32)
    if bias is None:
        bias = jnp.zeros((N,), jnp.float32)
    s2 = scale.reshape(1, N).astype(jnp.float32)
    c2 = bias.reshape(1, N).astype(jnp.float32)
    # Pick the row tile so the 'parallel' grid has >= 2 steps when possible
    # (keeps both v7x TensorCores busy and restores DMA/compute overlap).
    tm = min(TM, max(8, ((pl.cdiv(M, 2) + 7) // 8) * 8))
    has_res = residual is not None
    in_specs = [
        pl.BlockSpec((tm, K), lambda i: (i, 0)),
        pl.BlockSpec((K, N), lambda i: (0, 0)),
        pl.BlockSpec((1, N), lambda i: (0, 0)),
        pl.BlockSpec((1, N), lambda i: (0, 0)),
    ]
    args = [a, b, s2, c2]
    if has_res:
        in_specs.append(pl.BlockSpec((tm, N), lambda i: (i, 0)))
        args.append(residual.astype(jnp.bfloat16))
    return pl.pallas_call(
        functools.partial(_matmul_bn_act_kernel, relu=relu, has_res=has_res),
        out_shape=jax.ShapeDtypeStruct((M, N), out_dtype),
        grid=(pl.cdiv(M, tm),),
        in_specs=in_specs,
        out_specs=pl.BlockSpec((tm, N), lambda i: (i, 0)),
        compiler_params=pltpu.CompilerParams(
            dimension_semantics=("parallel",), vmem_limit_bytes=VMEM_LIMIT),
    )(*args)


# ----------------------------------------------------------------------------
# Direct stride-1 3x3 conv kernel (head / aux convs)
# ----------------------------------------------------------------------------
def _conv3x3_kernel(x_ref, w_ref, s_ref, c_ref, o_ref, *, dilation, relu, W, TH):
    """Stride-1 3x3 conv for one image row-tile: the 9 shifted windows are
    gathered in VMEM into one (TH*W, 9*Cin) operand and contracted against the
    (9*Cin, Cout) weight in a single MXU matmul; BN (+ReLU) in the epilogue."""
    d = dilation
    cin = x_ref.shape[-1]
    r0 = pl.program_id(1) * TH
    cols = []
    for i in range(3):
        for j in range(3):
            win = x_ref[0, pl.ds(r0 + i * d, TH), pl.ds(j * d, W), :]  # (TH, W, Cin)
            cols.append(win.reshape(TH * W, cin))
    acc = jnp.dot(jnp.concatenate(cols, axis=-1), w_ref[...],
                  preferred_element_type=jnp.float32)
    acc = acc * s_ref[...] + c_ref[...]
    if relu:
        acc = jnp.maximum(acc, 0.0)
    o_ref[0] = acc.astype(o_ref.dtype)


def conv3x3_direct(x, w, scale, bias, dilation, relu):
    """3x3, stride-1, padding==dilation conv; bf16 in/out, no HBM im2col."""
    N, H, W, Cin = x.shape
    Cout = w.shape[-1]
    d = dilation
    xp = jnp.pad(x.astype(jnp.bfloat16), ((0, 0), (d, d), (d, d), (0, 0)))
    wt = w.reshape(9 * Cin, Cout).astype(jnp.bfloat16)   # (i, j, c) tap order
    s2 = scale.reshape(1, Cout).astype(jnp.float32)
    c2 = bias.reshape(1, Cout).astype(jnp.float32)
    Hp, Wp = H + 2 * d, W + 2 * d
    # split output rows so the grid has >= 2 steps per image (pipeline length).
    RS = 2 if (H % 2 == 0 and ((H // 2) * W) % 8 == 0) else 1
    TH = H // RS
    out = pl.pallas_call(
        functools.partial(_conv3x3_kernel, dilation=d, relu=relu, W=W, TH=TH),
        out_shape=jax.ShapeDtypeStruct((N, H * W, Cout), jnp.bfloat16),
        grid=(N, RS),
        in_specs=[
            pl.BlockSpec((1, Hp, Wp, Cin), lambda n, r: (n, 0, 0, 0)),
            pl.BlockSpec((9 * Cin, Cout), lambda n, r: (0, 0)),
            pl.BlockSpec((1, Cout), lambda n, r: (0, 0)),
            pl.BlockSpec((1, Cout), lambda n, r: (0, 0)),
        ],
        out_specs=pl.BlockSpec((1, TH * W, Cout), lambda n, r: (n, r, 0)),
        compiler_params=pltpu.CompilerParams(
            dimension_semantics=("parallel", "parallel"),
            vmem_limit_bytes=VMEM_LIMIT),
    )(xp, wt, s2, c2)
    return out.reshape(N, H, W, Cout)


# ----------------------------------------------------------------------------
# Fused stride-1 bottleneck block kernel (1x1 -> dilated 3x3 -> 1x1 + shortcut)
# ----------------------------------------------------------------------------
def _bottleneck_kernel(x_ref, w1_ref, s1_ref, c1_ref, w2_ref, s2_ref, c2_ref,
                       w3_ref, s3_ref, c3_ref, *rest, dilation, H, W, has_down):
    if has_down:
        wd_ref, sd_ref, cd_ref, o_ref = rest
    else:
        (o_ref,) = rest
        wd_ref = sd_ref = cd_ref = None
    d = dilation
    cin = x_ref.shape[-1]
    mid = w1_ref.shape[-1]
    xi = x_ref[0].reshape(H * W, cin)                      # bf16

    # 1x1 reduce + BN + ReLU (stays in VMEM)
    t1 = jnp.dot(xi, w1_ref[...], preferred_element_type=jnp.float32)
    t1 = jnp.maximum(t1 * s1_ref[...] + c1_ref[...], 0.0).astype(jnp.bfloat16)

    # zero-pad the intermediate for the dilated 3x3 halo (value-level concat)
    t1 = t1.reshape(H, W, mid)
    zr = jnp.zeros((d, W, mid), jnp.bfloat16)
    t1 = jnp.concatenate([zr, t1, zr], axis=0)             # (H+2d, W, mid)
    zc = jnp.zeros((H + 2 * d, d, mid), jnp.bfloat16)
    t1 = jnp.concatenate([zc, t1, zc], axis=1)             # (H+2d, W+2d, mid)

    # dilated 3x3: gather the 9 shifted windows into one (H*W, 9*mid) operand
    # -> single K=9*mid MXU contraction (instead of 9 narrow K=mid matmuls).
    cols = []
    for i in range(3):
        for j in range(3):
            win = t1[i * d:i * d + H, j * d:j * d + W, :]
            cols.append(win.reshape(H * W, mid))
    t2 = jnp.dot(jnp.concatenate(cols, axis=-1), w2_ref[...],
                 preferred_element_type=jnp.float32)
    t2 = jnp.maximum(t2 * s2_ref[...] + c2_ref[...], 0.0).astype(jnp.bfloat16)

    # shortcut (identity or 1x1 projection + BN)
    if has_down:
        idn = jnp.dot(xi, wd_ref[...], preferred_element_type=jnp.float32)
        idn = idn * sd_ref[...] + cd_ref[...]
    else:
        idn = xi.astype(jnp.float32)

    # 1x1 expand + BN + residual add + ReLU
    t3 = jnp.dot(t2, w3_ref[...], preferred_element_type=jnp.float32)
    t3 = jnp.maximum(t3 * s3_ref[...] + c3_ref[...] + idn, 0.0)
    o_ref[0] = t3.astype(o_ref.dtype)


def bottleneck_fused(x, p):
    """One pallas_call per image for a stride-1 bottleneck block."""
    N, H, W, Cin = x.shape
    mid = p['w1'].shape[-1]
    Cout = p['w3'].shape[-1]
    d = p['dilation']
    has_down = 'wd' in p

    def vec(v, c):
        return v.reshape(1, c).astype(jnp.float32)

    args = [x.astype(jnp.bfloat16),
            p['w1'].reshape(Cin, mid).astype(jnp.bfloat16),
            vec(p['bn1'][0], mid), vec(p['bn1'][1], mid),
            p['w2'].reshape(9 * mid, mid).astype(jnp.bfloat16),
            vec(p['bn2'][0], mid), vec(p['bn2'][1], mid),
            p['w3'].reshape(mid, Cout).astype(jnp.bfloat16),
            vec(p['bn3'][0], Cout), vec(p['bn3'][1], Cout)]
    in_specs = [
        pl.BlockSpec((1, H, W, Cin), lambda n: (n, 0, 0, 0)),
        pl.BlockSpec((Cin, mid), lambda n: (0, 0)),
        pl.BlockSpec((1, mid), lambda n: (0, 0)),
        pl.BlockSpec((1, mid), lambda n: (0, 0)),
        pl.BlockSpec((9 * mid, mid), lambda n: (0, 0)),
        pl.BlockSpec((1, mid), lambda n: (0, 0)),
        pl.BlockSpec((1, mid), lambda n: (0, 0)),
        pl.BlockSpec((mid, Cout), lambda n: (0, 0)),
        pl.BlockSpec((1, Cout), lambda n: (0, 0)),
        pl.BlockSpec((1, Cout), lambda n: (0, 0)),
    ]
    if has_down:
        args += [p['wd'].reshape(Cin, Cout).astype(jnp.bfloat16),
                 vec(p['bnd'][0], Cout), vec(p['bnd'][1], Cout)]
        in_specs += [pl.BlockSpec((Cin, Cout), lambda n: (0, 0)),
                     pl.BlockSpec((1, Cout), lambda n: (0, 0)),
                     pl.BlockSpec((1, Cout), lambda n: (0, 0))]
    # TODO(synk): at real resolutions add a row-tile grid axis (recompute the
    # 3x3 halo rows) so per-step VMEM residency fits v7x's 64 MiB and each TC
    # gets >= 2 pipeline steps; at these demo sizes the whole image fits.
    out = pl.pallas_call(
        functools.partial(_bottleneck_kernel, dilation=d, H=H, W=W,
                          has_down=has_down),
        out_shape=jax.ShapeDtypeStruct((N, H * W, Cout), jnp.bfloat16),
        grid=(N,),
        in_specs=in_specs,
        out_specs=pl.BlockSpec((1, H * W, Cout), lambda n: (n, 0, 0)),
        compiler_params=pltpu.CompilerParams(
            dimension_semantics=("parallel",), vmem_limit_bytes=VMEM_LIMIT),
    )(*args)
    return out.reshape(N, H, W, Cout)


# ----------------------------------------------------------------------------
# Fused channel-reasoning module kernel (q/k/v, channel affinity, residual)
# ----------------------------------------------------------------------------
def _chan_reason_kernel(x_ref, wq_ref, wk_ref, wv_ref, wo_ref, so_ref, co_ref,
                        o_ref):
    xi = x_ref[0]                                                   # (HW, mid) bf16
    q = jnp.dot(xi, wq_ref[...], preferred_element_type=jnp.float32).astype(jnp.bfloat16)
    k = jnp.dot(xi, wk_ref[...], preferred_element_type=jnp.float32).astype(jnp.bfloat16)
    v = jnp.dot(xi, wv_ref[...], preferred_element_type=jnp.float32).astype(jnp.bfloat16)
    # E = Q^T K: contract spatial dim of both operands (no explicit transpose)
    energy = lax.dot_general(q, k, (((0,), (0,)), ((), ())),
                             preferred_element_type=jnp.float32)    # (inter, inter)
    m = jnp.max(energy, axis=-1, keepdims=True)
    e = jnp.exp(energy - m)
    denom = jnp.sum(e, axis=-1, keepdims=True)
    attn = (e * pl.reciprocal(denom, approx=True)).astype(jnp.bfloat16)
    # Y = V A^T
    y = lax.dot_general(v, attn, (((1,), (1,)), ((), ())),
                        preferred_element_type=jnp.float32).astype(jnp.bfloat16)
    out = jnp.dot(y, wo_ref[...], preferred_element_type=jnp.float32)
    out = out * so_ref[...] + co_ref[...] + xi.astype(jnp.float32)  # fused residual
    o_ref[0] = out.astype(o_ref.dtype)


def channel_reason_fused(x, p):
    """ChannelReasonModule in one kernel per image (no lane-offset q/k/v slicing)."""
    N, H, W, mid = x.shape
    inter = p['wq'].shape[-1]
    HW = H * W
    args = [x.reshape(N, HW, mid).astype(jnp.bfloat16),
            p['wq'].reshape(mid, inter).astype(jnp.bfloat16),
            p['wk'].reshape(mid, inter).astype(jnp.bfloat16),
            p['wv'].reshape(mid, inter).astype(jnp.bfloat16),
            p['wo'].reshape(inter, mid).astype(jnp.bfloat16),
            p['bno'][0].reshape(1, mid).astype(jnp.float32),
            p['bno'][1].reshape(1, mid).astype(jnp.float32)]
    out = pl.pallas_call(
        _chan_reason_kernel,
        out_shape=jax.ShapeDtypeStruct((N, HW, mid), jnp.bfloat16),
        grid=(N,),
        in_specs=[pl.BlockSpec((1, HW, mid), lambda n: (n, 0, 0)),
                  pl.BlockSpec((mid, inter), lambda n: (0, 0)),
                  pl.BlockSpec((mid, inter), lambda n: (0, 0)),
                  pl.BlockSpec((mid, inter), lambda n: (0, 0)),
                  pl.BlockSpec((inter, mid), lambda n: (0, 0)),
                  pl.BlockSpec((1, mid), lambda n: (0, 0)),
                  pl.BlockSpec((1, mid), lambda n: (0, 0))],
        out_specs=pl.BlockSpec((1, HW, mid), lambda n: (n, 0, 0)),
        compiler_params=pltpu.CompilerParams(
            dimension_semantics=("parallel",), vmem_limit_bytes=VMEM_LIMIT),
    )(*args)
    return out.reshape(N, H, W, mid)


# ----------------------------------------------------------------------------
# Conv / pooling / upsample glue around the kernels
# ----------------------------------------------------------------------------
def im2col(x, kh, kw, stride, dilation, padding):
    """x: [N,H,W,C] -> ([N*OH*OW, kh*kw*C], (N,OH,OW)). Tap order (i,j,c), c fastest."""
    N, H, W, C = x.shape
    OH = (H + 2 * padding - dilation * (kh - 1) - 1) // stride + 1
    OW = (W + 2 * padding - dilation * (kw - 1) - 1) // stride + 1
    xp = jnp.pad(x, ((0, 0), (padding, padding), (padding, padding), (0, 0)))
    cols = []
    for i in range(kh):
        for j in range(kw):
            h0, w0 = i * dilation, j * dilation
            patch = lax.slice(
                xp,
                (0, h0, w0, 0),
                (N, h0 + (OH - 1) * stride + 1, w0 + (OW - 1) * stride + 1, C),
                (1, stride, stride, 1))
            cols.append(patch)
    patches = jnp.concatenate(cols, axis=-1)
    return patches.reshape(N * OH * OW, kh * kw * C), (N, OH, OW)


def conv_bn_act(x, w, bn=None, stride=1, dilation=1, padding=0, relu=False,
                residual=None, out_dtype=jnp.bfloat16):
    """Conv2d (+folded BN +ReLU [+fused residual add]) via Pallas kernels."""
    KH, KW, Cin, Cout = w.shape
    if bn is not None:
        scale, bias = bn
    else:
        scale = jnp.ones((Cout,), jnp.float32)
        bias = jnp.zeros((Cout,), jnp.float32)

    if KH == 1 and KW == 1:
        if stride > 1:
            x = x[:, ::stride, ::stride, :]
        N, OH, OW, _ = x.shape
        r = residual.reshape(N * OH * OW, Cout) if residual is not None else None
        out = matmul_bn_act(x.reshape(N * OH * OW, Cin), w.reshape(Cin, Cout),
                            scale, bias, relu=relu, residual=r, out_dtype=out_dtype)
        return out.reshape(N, OH, OW, Cout)

    if (KH == 3 and KW == 3 and stride == 1 and padding == dilation
            and residual is None):
        return conv3x3_direct(x, w, scale, bias, dilation, relu)

    # TODO(synk): strided k>1 convs (7x7/s2 stem, layer2's first 3x3/s2) still use
    # an im2col matmul (bf16 patches); their strided windows aren't contiguous
    # in-kernel slices.
    patches, (N, OH, OW) = im2col(x.astype(jnp.bfloat16), KH, KW, stride,
                                  dilation, padding)
    r = residual.reshape(N * OH * OW, Cout) if residual is not None else None
    out = matmul_bn_act(patches, w.reshape(KH * KW * Cin, Cout),
                        scale, bias, relu=relu, residual=r, out_dtype=out_dtype)
    return out.reshape(N, OH, OW, Cout)


def maxpool2d(x, k=3, stride=2, padding=1):
    # glue (single use, not on the hot path): plain JAX window max.
    init = jnp.array(-jnp.inf, dtype=x.dtype)
    return lax.reduce_window(
        x, init, lax.max,
        (1, k, k, 1), (1, stride, stride, 1),
        ((0, 0), (padding, padding), (padding, padding), (0, 0)))


def _bilinear_matrix(out_size, in_size):
    # align_corners=True (matches the Upsample helper used by SRNet).
    w = np.zeros((out_size, in_size), np.float32)
    if in_size == 1 or out_size == 1:
        w[:, 0] = 1.0
        return w
    scale = (in_size - 1) / (out_size - 1)
    for o in range(out_size):
        src = o * scale
        i0 = int(np.floor(src))
        i1 = min(i0 + 1, in_size - 1)
        f = src - i0
        w[o, i0] += 1.0 - f
        w[o, i1] += f
    return w


def upsample_bilinear(x, size):
    """Bilinear (align_corners=True) upsample via two separable Pallas matmuls."""
    # TODO(synk): the relayouts around the two matmuls are plain-JAX transposes;
    # at these tiny head sizes they are negligible next to the backbone convs.
    N, H, W, C = x.shape
    OH, OW = size
    Wh = jnp.asarray(_bilinear_matrix(OH, H))
    Ww = jnp.asarray(_bilinear_matrix(OW, W))
    xh = jnp.transpose(x, (1, 0, 2, 3)).reshape(H, N * W * C)
    yh = matmul_bn_act(Wh, xh, out_dtype=jnp.bfloat16).reshape(OH, N, W, C)
    xw = jnp.transpose(yh, (2, 1, 0, 3)).reshape(W, N * OH * C)
    yw = matmul_bn_act(Ww, xw, out_dtype=jnp.float32).reshape(OW, N, OH, C)
    return jnp.transpose(yw, (1, 2, 0, 3))


# ----------------------------------------------------------------------------
# Parameters (deterministic synthetic init)
# ----------------------------------------------------------------------------
class ParamGen:
    def __init__(self, key):
        self.key = key

    def next(self):
        self.key, k = jax.random.split(self.key)
        return k

    def conv(self, kh, kw, cin, cout):
        fan_in = kh * kw * cin
        return jax.random.normal(self.next(), (kh, kw, cin, cout),
                                 jnp.float32) * np.sqrt(2.0 / fan_in)

    def bn(self, c, eps=1e-5):
        gamma = 1.0 + 0.1 * jax.random.normal(self.next(), (c,), jnp.float32)
        beta = 0.1 * jax.random.normal(self.next(), (c,), jnp.float32)
        mean = 0.1 * jax.random.normal(self.next(), (c,), jnp.float32)
        var = jnp.abs(1.0 + 0.1 * jax.random.normal(self.next(), (c,), jnp.float32))
        scale = gamma / jnp.sqrt(var + eps)
        bias = beta - mean * scale
        return (scale, bias)


def make_bottleneck(pg, cin, mid, cout, stride, dilation, downsample):
    p = {
        'w1': pg.conv(1, 1, cin, mid), 'bn1': pg.bn(mid),
        'w2': pg.conv(3, 3, mid, mid), 'bn2': pg.bn(mid),
        'w3': pg.conv(1, 1, mid, cout), 'bn3': pg.bn(cout),
        'stride': stride, 'dilation': dilation,
    }
    if downsample:
        p['wd'] = pg.conv(1, 1, cin, cout)
        p['bnd'] = pg.bn(cout)
    return p


def bottleneck_forward(x, p):
    s, d = p['stride'], p['dilation']
    if s == 1:
        # whole block fused into one kernel per image
        return bottleneck_fused(x, p)
    # stride-2 block (layer2's first): unfused path (3x3/s2 via im2col matmul)
    out = conv_bn_act(x, p['w1'], p['bn1'], relu=True)
    out = conv_bn_act(out, p['w2'], p['bn2'], stride=s, dilation=d, padding=d, relu=True)
    if 'wd' in p:
        identity = conv_bn_act(x, p['wd'], p['bnd'], stride=s, relu=False)
    else:
        identity = x
    # relu(bn3(conv3(out)) + identity): residual add + ReLU fused in the epilogue
    return conv_bn_act(out, p['w3'], p['bn3'], relu=True, residual=identity)


def make_layer(pg, cin, mid, cout, blocks, stride, dilation):
    ps = [make_bottleneck(pg, cin, mid, cout, stride, dilation, downsample=True)]
    for _ in range(blocks - 1):
        ps.append(make_bottleneck(pg, cout, mid, cout, 1, dilation, downsample=False))
    return ps


# TODO(synk): exact ModuleHead / ChannelReasonModule / Aux_Module sources are not
# provided with SRNet; implemented as canonical equivalents: 3x3 conv-bn-relu ->
# channel-attention (q/k/v 1x1 projections, channel affinity softmax, residual)
# -> 3x3 conv-bn-relu -> dropout (identity at eval) -> 1x1 classifier.
def make_head(pg, cin, mid, inter, num_classes):
    return {
        'wa': pg.conv(3, 3, cin, mid), 'bna': pg.bn(mid),
        'wq': pg.conv(1, 1, mid, inter),
        'wk': pg.conv(1, 1, mid, inter),
        'wv': pg.conv(1, 1, mid, inter),
        'wo': pg.conv(1, 1, inter, mid), 'bno': pg.bn(mid),
        'wb': pg.conv(3, 3, mid, mid), 'bnb': pg.bn(mid),
        'wc': pg.conv(1, 1, mid, num_classes),
        'bc': 0.01 * jax.random.normal(pg.next(), (num_classes,), jnp.float32),
    }


def head_forward(x, p):
    h = conv_bn_act(x, p['wa'], p['bna'], padding=1, relu=True)
    h = channel_reason_fused(h, p)
    h = conv_bn_act(h, p['wb'], p['bnb'], padding=1, relu=True)
    # dropout(0.1) is identity in eval mode
    num_classes = p['bc'].shape[0]
    return conv_bn_act(h, p['wc'],
                       bn=(jnp.ones((num_classes,), jnp.float32), p['bc']),
                       out_dtype=jnp.float32)


def make_aux(pg, cin, mid, num_classes):
    return {
        'w1': pg.conv(3, 3, cin, mid), 'bn1': pg.bn(mid),
        'w2': pg.conv(1, 1, mid, num_classes),
        'b2': 0.01 * jax.random.normal(pg.next(), (num_classes,), jnp.float32),
    }


def aux_forward(x, p):
    h = conv_bn_act(x, p['w1'], p['bn1'], padding=1, relu=True)
    # dropout2d(0.1) is identity in eval mode
    num_classes = p['b2'].shape[0]
    return conv_bn_act(h, p['w2'],
                       bn=(jnp.ones((num_classes,), jnp.float32), p['b2']),
                       out_dtype=jnp.float32)


def init_srnet(key, num_classes=5):
    pg = ParamGen(key)
    # channel widths scaled /16 vs. the real ResNet-50/101 backbone (synthetic demo)
    stem = 8
    louts = [16, 32, 64, 128]
    lmids = [4, 8, 16, 32]
    blocks = [2, 2, 2, 2]   # TODO(synk): ResNet-50 uses [3,4,6,3]; reduced for demo size
    strides = [1, 2, 1, 1]  # variant 'D': layer3/layer4 stride -> 1
    dils = [1, 1, 2, 4]     # variant 'D': layer3 dilation 2, layer4 dilation 4
    params = {'stem_w': pg.conv(7, 7, 3, stem), 'stem_bn': pg.bn(stem)}
    layers, cin = [], stem
    for li in range(4):
        layers.append(make_layer(pg, cin, lmids[li], louts[li],
                                 blocks[li], strides[li], dils[li]))
        cin = louts[li]
    params['layers'] = layers
    params['head'] = make_head(pg, louts[3], 32, 16, num_classes)
    params['aux'] = make_aux(pg, louts[2], 16, num_classes)
    return params


def srnet_forward(params, x_nchw):
    """Eval-mode SRNet.forward: returns (main_out, aux_out) in NCHW at input resolution."""
    x = jnp.transpose(x_nchw, (0, 2, 3, 1)).astype(jnp.float32)   # NCHW -> NHWC
    x_size = x.shape[1:3]
    # layer0: conv7x7/2 + bn + relu + maxpool3x3/2
    x0 = conv_bn_act(x, params['stem_w'], params['stem_bn'],
                     stride=2, padding=3, relu=True)
    x0 = maxpool2d(x0, 3, 2, 1)
    h = x0
    feats = []
    for layer in params['layers']:
        for p in layer:
            h = bottleneck_forward(h, p)
        feats.append(h)
    x3, x4 = feats[2], feats[3]
    aux_out = aux_forward(x3, params['aux'])
    main_out = head_forward(x4, params['head'])
    # main + aux share the interpolation matrices: one fused (lane-denser) upsample.
    nc = main_out.shape[-1]
    both = jnp.concatenate([main_out, aux_out], axis=-1)
    both_up = upsample_bilinear(both, x_size)
    main_up, aux_up = both_up[..., :nc], both_up[..., nc:]
    # eval mode (not training): reference returns main_out; aux computed for parity.
    return (jnp.transpose(main_up, (0, 3, 1, 2)),
            jnp.transpose(aux_up, (0, 3, 1, 2)))


if __name__ == "__main__":
    key = jax.random.PRNGKey(0)
    pkey, xkey = jax.random.split(key)
    num_classes = 5
    params = init_srnet(pkey, num_classes=num_classes)
    x = jax.random.normal(xkey, (2, 3, 64, 64), jnp.float32)   # NCHW, like PyTorch
    main_out, aux_out = srnet_forward(params, x)
    main_out = jax.block_until_ready(main_out)
    jax.block_until_ready(aux_out)
    assert main_out.shape == (2, num_classes, 64, 64), main_out.shape
    assert aux_out.shape == (2, num_classes, 64, 64), aux_out.shape
    assert bool(jnp.all(jnp.isfinite(main_out)))
    print("KERNEL_OK")
</pallas_src>

<mosaic_0001>
module attributes {stable_mosaic.version = 11 : i64} {
  func.func @_matmul_bn_act_kernel(%arg0: i32, %arg1: memref<256x147xbf16, #tpu.memory_space<vmem>>, %arg2: memref<147x8xbf16, #tpu.memory_space<vmem>>, %arg3: memref<1x8xf32, #tpu.memory_space<vmem>>, %arg4: memref<1x8xf32, #tpu.memory_space<vmem>>, %arg5: memref<256x8xbf16, #tpu.memory_space<vmem>>) attributes {dimension_semantics = [#tpu.dimension_semantics<parallel>], iteration_bounds = array<i64: 8>, scalar_prefetch = 0 : i64, scratch_operands = 0 : i64, tpu.core_type = #tpu.core_type<tc>, window_params = [{transform_indices = @transform_0, window_bounds = array<i64: 256, 147>}, {pipeline_mode = #tpu.pipeline_mode<synchronous>, transform_indices = @transform_1, window_bounds = array<i64: 147, 8>}, {pipeline_mode = #tpu.pipeline_mode<synchronous>, transform_indices = @transform_2, window_bounds = array<i64: 1, 8>}, {pipeline_mode = #tpu.pipeline_mode<synchronous>, transform_indices = @transform_3, window_bounds = array<i64: 1, 8>}, {transform_indices = @transform_4, window_bounds = array<i64: 256, 8>}]} {
    %c0 = arith.constant 0 : index
    %c0_0 = arith.constant 0 : index
    %0 = vector.load %arg1[%c0, %c0_0] : memref<256x147xbf16, #tpu.memory_space<vmem>>, vector<256x147xbf16>
    %c0_1 = arith.constant 0 : index
    %c0_2 = arith.constant 0 : index
    %1 = vector.load %arg2[%c0_1, %c0_2] : memref<147x8xbf16, #tpu.memory_space<vmem>>, vector<147x8xbf16>
    %cst = arith.constant dense<0.000000e+00> : vector<256x8xf32>
    %2 = tpu.matmul %0, %1, %cst {dimension_numbers = #tpu.dot_dimension_numbers<[1], [0], [0], [1], [0, 0, 1, 1], [], []>} : vector<256x147xbf16>, vector<147x8xbf16>, vector<256x8xf32> -> vector<256x8xf32>
    %c0_3 = arith.constant 0 : index
    %c0_4 = arith.constant 0 : index
    %3 = vector.load %arg3[%c0_3, %c0_4] : memref<1x8xf32, #tpu.memory_space<vmem>>, vector<1x8xf32>
    %4 = vector.broadcast %3 : vector<1x8xf32> to vector<256x8xf32>
    %5 = arith.mulf %2, %4 : vector<256x8xf32>
    %c0_5 = arith.constant 0 : index
    %c0_6 = arith.constant 0 : index
    %6 = vector.load %arg4[%c0_5, %c0_6] : memref<1x8xf32, #tpu.memory_space<vmem>>, vector<1x8xf32>
    %7 = vector.broadcast %6 : vector<1x8xf32> to vector<256x8xf32>
    %8 = arith.addf %5, %7 : vector<256x8xf32>
    %cst_7 = arith.constant 0.000000e+00 : f32
    %9 = vector.broadcast %cst_7 : f32 to vector<256x8xf32>
    %10 = arith.maximumf %8, %9 : vector<256x8xf32>
    %11 = arith.truncf %10 : vector<256x8xf32> to vector<256x8xbf16>
    %c0_8 = arith.constant 0 : index
    %c0_9 = arith.constant 0 : index
    %12 = vector.load %arg5[%c0_8, %c0_9] : memref<256x8xbf16, #tpu.memory_space<vmem>>, vector<256x8xbf16>
    tpu.vector_store %arg5[%c0_8, %c0_9], %11 {strides = array<i32>} : memref<256x8xbf16, #tpu.memory_space<vmem>>, vector<256x8xbf16>,
    return
  }
  func.func @transform_0(%arg0: i32) -> (i32, i32) {
    %c0_i32 = arith.constant 0 : i32
    %c0_i32_0 = arith.constant 0 : i32
    return %arg0, %c0_i32 : i32, i32
  }
  func.func @transform_1(%arg0: i32) -> (i32, i32) {
    %c0_i32 = arith.constant 0 : i32
    %c0_i32_0 = arith.constant 0 : i32
    %c0_i32_1 = arith.constant 0 : i32
    return %c0_i32, %c0_i32_0 : i32, i32
  }
  func.func @transform_2(%arg0: i32) -> (i32, i32) {
    %c0_i32 = arith.constant 0 : i32
    %c0_i32_0 = arith.constant 0 : i32
    %c0_i32_1 = arith.constant 0 : i32
    return %c0_i32, %c0_i32_0 : i32, i32
  }
  func.func @transform_3(%arg0: i32) -> (i32, i32) {
    %c0_i32 = arith.constant 0 : i32
    %c0_i32_0 = arith.constant 0 : i32
    %c0_i32_1 = arith.constant 0 : i32
    return %c0_i32, %c0_i32_0 : i32, i32
  }
  func.func @transform_4(%arg0: i32) -> (i32, i32) {
    %c0_i32 = arith.constant 0 : i32
    %c0_i32_0 = arith.constant 0 : i32
    return %arg0, %c0_i32 : i32, i32
  }
}

</mosaic_0001>

<llo_original>
// kernel: tpu_custom_call.1
$region0: #{tpu_custom_call.1}
  #allocation0 [shape = 'u32[]', space=smem, size = 0x4, offset = 0x4, fixed_abs, tag = 'smem constant byte address 0x4 - core index']
  #allocation1 [shape = 'u32[144,128]{1,0:T(1,128)}', space=vmem, size = 0x12000, scoped, tag = 'internal scratch']
  %s0 = inlined_call_operand.vmem [shape: bf16[2048,147], index: 0, kind: input, shape index: {}]
  %s1 = inlined_call_operand.vmem [shape: bf16[147,8], index: 1, kind: input, shape index: {}]
  %s2 = inlined_call_operand.vmem [shape: f32[1,8], index: 2, kind: input, shape index: {}]
  %s3 = inlined_call_operand.vmem [shape: f32[1,8], index: 3, kind: input, shape index: {}]
  %s4 = inlined_call_operand.vmem [shape: bf16[2048,8], index: 4, kind: output, shape index: {}]
  %s5 = sld [smem:[#allocation0]]
  $region49: #{tpu_custom_call.1} parent=0
    _
  %s7 = ssub.s32 1, %s5
  %s8 = scalar_select 0, %s7, %s5
  loop: start=0, step=1, limit=10
  $region2: #{tpu_custom_call.1} parent=0 // loop_pre_header
    _
  $region3: #{tpu_custom_call.1} parent=0 // loop_header
    %s10 = sphi 0, %s14
    %p11 = scmp.ge.s32.totalorder %s10, 10
    %s20 = sphi 0, %s22
    %s23 = sphi 0, %s20
    %s24 = sphi 0, %s23
    %s40 = sphi 0, %s24
    %s44 = sphi 0, %s44
    %s46 = sphi 0, %s44
    %s47 = sphi 0, %s46
    %s61 = sphi 0, %s47
    %s65 = sphi 0, %s65
    %s67 = sphi 0, %s65
    %s68 = sphi 0, %s67
    %s82 = sphi 0, %s68
    %s86 = sphi 0, %s86
    %s88 = sphi 0, %s86
    %s89 = sphi 0, %s88
    %s103 = sphi 0, %s89
    %s109 = sphi 0, %s111
    %s112 = sphi 0, %s109
    %s113 = sphi 0, %s112
    %s129 = sphi 0, %s113
  $region4: #{tpu_custom_call.1} parent=0 // loop_header_branch
    %13 = sbr.rel (%p11) target = $region8
  $region5: #{tpu_custom_call.1} parent=0 // loop_body
    %s15 = ssub.s32 %s10, 1
    %s16 = ssub.s32 %s10, 2
    %s17 = sadd.s32 %s10, 1
    %s18 = ssub.s32 %s10, %s17
    %p19 = scmp.eq.s32.totalorder %s18, 0
    %s21 = sadd.s32 %s20, 1
    %s22 = scalar_select %p19, %s20, %s21
    %p25 = pneg %p19
    %p26 = scmp.eq.s32.totalorder %s10, 7
    %p27 = por %p25, %p26
    %p28 = scmp.ne.s32.totalorder %s20, %s23
    %p29 = scmp.eq.s32.totalorder %s10, 0
    %p30 = por %p28, %p29
    %p31 = scmp.ne.s32.totalorder %s20, %s23
    %p32 = scmp.eq.s32.totalorder %s15, 7
    %p33 = por %p31, %p32
    %p34 = scmp.ne.s32.totalorder %s23, %s24
    %p35 = scmp.eq.s32.totalorder %s15, 0
    %p36 = por %p34, %p35
    %p37 = scmp.ne.s32.totalorder %s23, %s24
    %p38 = scmp.eq.s32.totalorder %s16, 7
    %p39 = por %p37, %p38
    %p41 = scmp.ne.s32.totalorder %s24, %s40
    %p42 = scmp.eq.s32.totalorder %s16, 0
    %p43 = por %p41, %p42
    %s45 = sadd.s32 %s44, 1
    %p48 = scmp.eq.s32.totalorder %s10, 7
    %p49 = scmp.ne.s32.totalorder %s44, %s46
    %p50 = scmp.eq.s32.totalorder %s10, 0
    %p51 = por %p49, %p50
    %p52 = scmp.ne.s32.totalorder %s44, %s46
    %p53 = scmp.eq.s32.totalorder %s15, 7
    %p54 = por %p52, %p53
    %p55 = scmp.ne.s32.totalorder %s46, %s47
    %p56 = scmp.eq.s32.totalorder %s15, 0
    %p57 = por %p55, %p56
    %p58 = scmp.ne.s32.totalorder %s46, %s47
    %p59 = scmp.eq.s32.totalorder %s16, 7
    %p60 = por %p58, %p59
    %p62 = scmp.ne.s32.totalorder %s47, %s61
    %p63 = scmp.eq.s32.totalorder %s16, 0
    %p64 = por %p62, %p63
    %s66 = sadd.s32 %s65, 1
    %p69 = scmp.eq.s32.totalorder %s10, 7
    %p70 = scmp.ne.s32.totalorder %s65, %s67
    %p71 = scmp.eq.s32.totalorder %s10, 0
    %p72 = por %p70, %p71
    %p73 = scmp.ne.s32.totalorder %s65, %s67
    %p74 = scmp.eq.s32.totalorder %s15, 7
    %p75 = por %p73, %p74
    %p76 = scmp.ne.s32.totalorder %s67, %s68
    %p77 = scmp.eq.s32.totalorder %s15, 0
    %p78 = por %p76, %p77
    %p79 = scmp.ne.s32.totalorder %s67, %s68
    %p80 = scmp.eq.s32.totalorder %s16, 7
    %p81 = por %p79, %p80
    %p83 = scmp.ne.s32.totalorder %s68, %s82
    %p84 = scmp.eq.s32.totalorder %s16, 0
    %p85 = por %p83, %p84
    %s87 = sadd.s32 %s86, 1
    %p90 = scmp.eq.s32.totalorder %s10, 7
    %p91 = scmp.ne.s32.totalorder %s86, %s88
    %p92 = scmp.eq.s32.totalorder %s10, 0
    %p93 = por %p91, %p92
    %p94 = scmp.ne.s32.totalorder %s86, %s88
    %p95 = scmp.eq.s32.totalorder %s15, 7
    %p96 = por %p94, %p95
    %p97 = scmp.ne.s32.totalorder %s88, %s89
    %p98 = scmp.eq.s32.totalorder %s15, 0
    %p99 = por %p97, %p98
    %p100 = scmp.ne.s32.totalorder %s88, %s89
    %p101 = scmp.eq.s32.totalorder %s16, 7
    %p102 = por %p100, %p101
    %p104 = scmp.ne.s32.totalorder %s89, %s103
    %p105 = scmp.eq.s32.totalorder %s16, 0
    %p106 = por %p104, %p105
    %s107 = ssub.s32 %s10, %s17
    %p108 = scmp.eq.s32.totalorder %s107, 0
    %s110 = sadd.s32 %s109, 1
    %s111 = scalar_select %p108, %s109, %s110
    %p114 = pneg %p108
    %p115 = scmp.eq.s32.totalorder %s10, 7
    %p116 = por %p114, %p115
    %p117 = scmp.ne.s32.totalorder %s109, %s112
    %p118 = scmp.eq.s32.totalorder %s10, 0
    %p119 = por %p117, %p118
    %p120 = scmp.ne.s32.totalorder %s109, %s112
    %p121 = scmp.eq.s32.totalorder %s15, 7
    %p122 = por %p120, %p121
    %p123 = scmp.ne.s32.totalorder %s112, %s113
    %p124 = scmp.eq.s32.totalorder %s15, 0
    %p125 = por %p123, %p124
    %p126 = scmp.ne.s32.totalorder %s112, %s113
    %p127 = scmp.eq.s32.totalorder %s16, 7
    %p128 = por %p126, %p127
    %p130 = scmp.ne.s32.totalorder %s113, %s129
    %p131 = scmp.eq.s32.totalorder %s16, 0
    %p132 = por %p130, %p131
    %p133 = scmp.le.s32.totalorder 1, %s10
    %p134 = scmp.lt.s32.totalorder %s10, 9
    %p135 = pnand %p133, %p134
    %p136 = pneg %p135
    // Predicated region
    $region9: #{tpu_custom_call.1} parent=5 // pred_check
      _
    $region10: #{tpu_custom_call.1} parent=5 // pred_check_branch
      %138 = sbr.rel (%p135) target = $region12
    $region11: #{tpu_custom_call.1} parent=5 // pred_region
      %s139 = ssub.s32 %s10, 1
      // Predicated region
      $region13: #{tpu_custom_call.1} parent=11 // pred_check
        %p140 = pneg %p57
      $region14: #{tpu_custom_call.1} parent=11 // pred_check_branch
        %142 = sbr.rel (%p140) target = $region16
      $region15: #{tpu_custom_call.1} parent=11 // pred_region
        _
      $region16: #{tpu_custom_call.1} parent=11 // pred_fallthru
        _
      // Predicated region
      $region17: #{tpu_custom_call.1} parent=11 // pred_check
        %p143 = pneg %p78
      $region18: #{tpu_custom_call.1} parent=11 // pred_check_branch
        %145 = sbr.rel (%p143) target = $region20
      $region19: #{tpu_custom_call.1} parent=11 // pred_region
        _
      $region20: #{tpu_custom_call.1} parent=11 // pred_fallthru
        _
      // Predicated region
      $region21: #{tpu_custom_call.1} parent=11 // pred_check
        %p146 = pneg %p99
      $region22: #{tpu_custom_call.1} parent=11 // pred_check_branch
        %148 = sbr.rel (%p146) target = $region24
      $region23: #{tpu_custom_call.1} parent=11 // pred_region
        _
      $region24: #{tpu_custom_call.1} parent=11 // pred_fallthru
        _
    $region12: #{tpu_custom_call.1} parent=5 // pred_fallthru
      _
    %p149 = scmp.lt.s32.totalorder %s10, 8
    // Predicated region
    $region25: #{tpu_custom_call.1} parent=5 // pred_check
      %p150 = pneg %p149
    $region26: #{tpu_custom_call.1} parent=5 // pred_check_branch
      %152 = sbr.rel (%p150) target = $region28
    $region27: #{tpu_custom_call.1} parent=5 // pred_region
      // Predicated region
      $region29: #{tpu_custom_call.1} parent=27 // pred_check
        %p153 = pneg %p30
      $region30: #{tpu_custom_call.1} parent=27 // pred_check_branch
        %155 = sbr.rel (%p153) target = $region32
      $region31: #{tpu_custom_call.1} parent=27 // pred_region
        %s156 = smul.u32 32, %s10
        %p157 = scmp.lt.s32.totalorder %s156, 255
        %s158 = scalar_select %p157, %s156, 255
        %s159 = smul.addr %s158, 2
        %s160 = smul.addr %s159, 4
        %s161 = scalar_lea.vmem %s0, %s160
        %s162 = smul.u32 32, %s10
      $region32: #{tpu_custom_call.1} parent=27 // pred_fallthru
        _
    $region28: #{tpu_custom_call.1} parent=5 // pred_fallthru
      _
    %p163 = scmp.le.s32.totalorder 1, %s10
    %p164 = scmp.lt.s32.totalorder %s10, 9
    %p165 = pnand %p163, %p164
    %p166 = pneg %p165
    // Predicated region
    $region33: #{tpu_custom_call.1} parent=5 // pred_check
      _
    $region34: #{tpu_custom_call.1} parent=5 // pred_check_branch
      %168 = sbr.rel (%p165) target = $region36
    $region35: #{tpu_custom_call.1} parent=5 // pred_region
      %s169 = ssub.s32 %s10, 1
      %s170 = smul.u32 32, %s15
      %p171 = scmp.lt.s32.totalorder %s170, 255
      %s172 = scalar_select %p171, %s170, 255
      %s173 = smul.addr %s172, 2
      %s174 = smul.addr %s173, 4
      %s175 = scalar_lea.vmem %s0, %s174
      %p176 = pneg %p36
      %p177 = pneg %p33
      %p178 = pneg %p57
      %p179 = pneg %p54
      %p180 = pneg %p78
      %p181 = pneg %p75
      %p182 = pneg %p99
      %p183 = pneg %p96
      %p184 = pneg %p125
      %p185 = pneg %p122
      %s186 = smul.u32 32, %s15
      %p187 = scmp.lt.s32.totalorder %s186, 255
      %s188 = scalar_select %p187, %s186, 255
      %s189 = smul.addr %s188, 4
      %s190 = scalar_lea.vmem %s4, %s189
      %s191 = smul.u32 32, %s15
      %p192 = scmp.lt.s32.totalorder %s191, 255
      %s193 = scalar_select %p192, %s191, 255
      %s194 = smul.addr %s193, 2
      %s195 = smul.addr %s194, 4
      %s196 = scalar_lea.vmem %s0, %s195
      %s197 = smul.u32 32, %s15
      %s198 = smul.u32 32, %s15
      %p199 = scmp.lt.s32.totalorder %s198, 255
      %s200 = scalar_select %p199, %s198, 255
      %s201 = smul.addr %s200, 4
      %s202 = scalar_lea.vmem %s4, %s201
      %s203 = smul.u32 32, %s15
      %v205 = vld [vmem:[%s196] sm:$0xff]
      %v206 = vld [vmem:[%s196 + $0x8] sm:$0xff]
      %v207 = vld [vmem:[%s196 + $0x10] sm:$0xff]
      %v208 = vld [vmem:[%s196 + $0x18] sm:$0xff]
      %v209 = vld [vmem:[%s196 + $0x20] sm:$0xff]
      %v210 = vld [vmem:[%s196 + $0x28] sm:$0xff]
      %v211 = vld [vmem:[%s196 + $0x30] sm:$0xff]
      %v212 = vld [vmem:[%s196 + $0x38] sm:$0xff]
      %v213 = vld [vmem:[%s196 + $0x40] sm:$0xff]
      %v214 = vld [vmem:[%s196 + $0x48] sm:$0xff]
      %v215 = vld [vmem:[%s196 + $0x50] sm:$0xff]
      %v216 = vld [vmem:[%s196 + $0x58] sm:$0xff]
      %v217 = vld [vmem:[%s196 + $0x60] sm:$0xff]
      %v218 = vld [vmem:[%s196 + $0x68] sm:$0xff]
      %v219 = vld [vmem:[%s196 + $0x70] sm:$0xff]
      %v220 = vld [vmem:[%s196 + $0x78] sm:$0xff]
      %v221 = vld [vmem:[%s196 + $0x80] sm:$0xff]
      %v222 = vld [vmem:[%s196 + $0x88] sm:$0xff]
      %v223 = vld [vmem:[%s196 + $0x90] sm:$0xff]
      %v224 = vld [vmem:[%s196 + $0x98] sm:$0xff]
      %v225 = vld [vmem:[%s196 + $0xa0] sm:$0xff]
      %v226 = vld [vmem:[%s196 + $0xa8] sm:$0xff]
      %v227 = vld [vmem:[%s196 + $0xb0] sm:$0xff]
      %v228 = vld [vmem:[%s196 + $0xb8] sm:$0xff]
      %v229 = vld [vmem:[%s196 + $0xc0] sm:$0xff]
      %v230 = vld [vmem:[%s196 + $0xc8] sm:$0xff]
      %v231 = vld [vmem:[%s196 + $0xd0] sm:$0xff]
      %v232 = vld [vmem:[%s196 + $0xd8] sm:$0xff]
      %v233 = vld [vmem:[%s196 + $0xe0] sm:$0xff]
      %v234 = vld [vmem:[%s196 + $0xe8] sm:$0xff]
      %v235 = vld [vmem:[%s196 + $0xf0] sm:$0xff]
      %v236 = vld [vmem:[%s196 + $0xf8] sm:$0xff]
      %v237 = vld [vmem:[%s1] sm:$0xf]
      %v238 = vld [vmem:[%s1 + $0x4] sm:$0xf]
      %v239 = vld [vmem:[%s1 + $0x8] sm:$0xf]
      %v240 = vld [vmem:[%s1 + $0xc] sm:$0xf]
      %v241 = vld [vmem:[%s1 + $0x10] sm:$0xf]
      %v242 = vld [vmem:[%s1 + $0x14] sm:$0xf]
      %v243 = vld [vmem:[%s1 + $0x18] sm:$0xf]
      %v244 = vld [vmem:[%s1 + $0x1c] sm:$0xf]
      %v245 = vld [vmem:[%s1 + $0x20] sm:$0xf]
      %v246 = vld [vmem:[%s1 + $0x24] sm:$0xf]
      %v247 = vld [vmem:[%s1 + $0x28] sm:$0xf]
      %v248 = vld [vmem:[%s1 + $0x2c] sm:$0xf]
      %v249 = vld [vmem:[%s1 + $0x30] sm:$0xf]
      %v250 = vld [vmem:[%s1 + $0x34] sm:$0xf]
      %v251 = vld [vmem:[%s1 + $0x38] sm:$0xf]
      %v252 = vld [vmem:[%s1 + $0x3c] sm:$0xf]
      %v253 = vld [vmem:[%s1 + $0x40] sm:$0xf]
      %v254 = vld [vmem:[%s1 + $0x44] sm:$0xf]
      %v255 = vld [vmem:[%s1 + $0x48] sm:$0x3]
      %v288 = vunpack.c.l.b16 %v205
      %v289 = vunpack.c.h.b16 %v205
      %v290 = vunpack.c.l.b16 %v206
      %v291 = vunpack.c.h.b16 %v206
      %v292 = vunpack.c.l.b16 %v207
      %v293 = vunpack.c.h.b16 %v207
      %v294 = vunpack.c.l.b16 %v208
      %v295 = vunpack.c.h.b16 %v208
      %v296 = vunpack.c.l.b16 %v209
      %v297 = vunpack.c.h.b16 %v209
      %v298 = vunpack.c.l.b16 %v210
      %v299 = vunpack.c.h.b16 %v210
      %v300 = vunpack.c.l.b16 %v211
      %v301 = vunpack.c.h.b16 %v211
      %v302 = vunpack.c.l.b16 %v212
      %v303 = vunpack.c.h.b16 %v212
      %v304 = vunpack.c.l.b16 %v213
      %v305 = vunpack.c.h.b16 %v213
      %v306 = vunpack.c.l.b16 %v214
      %v307 = vunpack.c.h.b16 %v214
      %v308 = vunpack.c.l.b16 %v215
      %v309 = vunpack.c.h.b16 %v215
      %v310 = vunpack.c.l.b16 %v216
      %v311 = vunpack.c.h.b16 %v216
      %v312 = vunpack.c.l.b16 %v217
      %v313 = vunpack.c.h.b16 %v217
      %v314 = vunpack.c.l.b16 %v218
      %v315 = vunpack.c.h.b16 %v218
      %v316 = vunpack.c.l.b16 %v219
      %v317 = vunpack.c.h.b16 %v219
      %v318 = vunpack.c.l.b16 %v220
      %v319 = vunpack.c.h.b16 %v220
      %v320 = vunpack.c.l.b16 %v221
      %v321 = vunpack.c.h.b16 %v221
      %v322 = vunpack.c.l.b16 %v222
      %v323 = vunpack.c.h.b16 %v222
      %v324 = vunpack.c.l.b16 %v223
      %v325 = vunpack.c.h.b16 %v223
      %v326 = vunpack.c.l.b16 %v224
      %v327 = vunpack.c.h.b16 %v224
      %v328 = vunpack.c.l.b16 %v225
      %v329 = vunpack.c.h.b16 %v225
      %v330 = vunpack.c.l.b16 %v226
      %v331 = vunpack.c.h.b16 %v226
      %v332 = vunpack.c.l.b16 %v227
      %v333 = vunpack.c.h.b16 %v227
      %v334 = vunpack.c.l.b16 %v228
      %v335 = vunpack.c.h.b16 %v228
      %v336 = vunpack.c.l.b16 %v229
      %v337 = vunpack.c.h.b16 %v229
      %v338 = vunpack.c.l.b16 %v230
      %v339 = vunpack.c.h.b16 %v230
      %v340 = vunpack.c.l.b16 %v231
      %v341 = vunpack.c.h.b16 %v231
      %v342 = vunpack.c.l.b16 %v232
      %v343 = vunpack.c.h.b16 %v232
      %v344 = vunpack.c.l.b16 %v233
      %v345 = vunpack.c.h.b16 %v233
      %v346 = vunpack.c.l.b16 %v234
      %v347 = vunpack.c.h.b16 %v234
      %v348 = vunpack.c.l.b16 %v235
      %v349 = vunpack.c.h.b16 %v235
      %v350 = vunpack.c.l.b16 %v236
      %v351 = vunpack.c.h.b16 %v236
      %v352 = vpack.c.b16 %v290, %v288
      %v353 = vpack.c.b16 %v291, %v289
      %v354 = vpack.c.b16 %v294, %v292
      %v355 = vpack.c.b16 %v295, %v293
      %v356 = vpack.c.b16 %v298, %v296
      %v357 = vpack.c.b16 %v299, %v297
      %v358 = vpack.c.b16 %v302, %v300
      %v359 = vpack.c.b16 %v303, %v301
      %v360 = vpack.c.b16 %v306, %v304
      %v361 = vpack.c.b16 %v307, %v305
      %v362 = vpack.c.b16 %v310, %v308
      %v363 = vpack.c.b16 %v311, %v309
      %v364 = vpack.c.b16 %v314, %v312
      %v365 = vpack.c.b16 %v315, %v313
      %v366 = vpack.c.b16 %v318, %v316
      %v367 = vpack.c.b16 %v319, %v317
      %v368 = vpack.c.b16 %v322, %v320
      %v369 = vpack.c.b16 %v323, %v321
      %v370 = vpack.c.b16 %v326, %v324
      %v371 = vpack.c.b16 %v327, %v325
      %v372 = vpack.c.b16 %v330, %v328
      %v373 = vpack.c.b16 %v331, %v329
      %v374 = vpack.c.b16 %v334, %v332
      %v375 = vpack.c.b16 %v335, %v333
      %v376 = vpack.c.b16 %v338, %v336
      %v377 = vpack.c.b16 %v339, %v337
      %v378 = vpack.c.b16 %v342, %v340
      %v379 = vpack.c.b16 %v343, %v341
      %v380 = vpack.c.b16 %v346, %v344
      %v381 = vpack.c.b16 %v347, %v345
      %v382 = vpack.c.b16 %v350, %v348
      %v383 = vpack.c.b16 %v351, %v349
      %v419 = vunpack.c.l.b16 %v237
      %v420 = vunpack.c.l.b16 %v238
      %v421 = vunpack.c.l.b16 %v239
      %v422 = vunpack.c.l.b16 %v240
      %v423 = vunpack.c.l.b16 %v241
      %v424 = vunpack.c.l.b16 %v242
      %v425 = vunpack.c.l.b16 %v243
      %v426 = vunpack.c.l.b16 %v244
      %v427 = vunpack.c.l.b16 %v245
      %v428 = vunpack.c.l.b16 %v246
      %v429 = vunpack.c.l.b16 %v247
      %v430 = vunpack.c.l.b16 %v248
      %v431 = vunpack.c.l.b16 %v249
      %v432 = vunpack.c.l.b16 %v250
      %v433 = vunpack.c.l.b16 %v251
      %v434 = vunpack.c.l.b16 %v252
      %v435 = vunpack.c.l.b16 %v253
      %v436 = vunpack.c.l.b16 %v254
      %v437 = vunpack.c.l.b16 %v255
      %v438 = vpack.c.b16 %v420, %v419
      %v439 = vpack.c.b16 %v422, %v421
      %v440 = vpack.c.b16 %v424, %v423
      %v441 = vpack.c.b16 %v426, %v425
      %v442 = vpack.c.b16 %v428, %v427
      %v443 = vpack.c.b16 %v430, %v429
      %v444 = vpack.c.b16 %v432, %v431
      %v445 = vpack.c.b16 %v434, %v433
      %v446 = vpack.c.b16 %v436, %v435
      %v447 = vpack.c.b16 %v437, %v437
      %vm457 = vcmask 154624
      %v459 = vsel %vm457, %v353, 0
      %v462 = vsel %vm457, %v355, 0
      %v465 = vsel %vm457, %v357, 0
      %v468 = vsel %vm457, %v359, 0
      %v471 = vsel %vm457, %v361, 0
      %v474 = vsel %vm457, %v363, 0
      %v477 = vsel %vm457, %v365, 0
      %v480 = vsel %vm457, %v367, 0
      %v483 = vsel %vm457, %v369, 0
      %v486 = vsel %vm457, %v371, 0
      %v489 = vsel %vm457, %v373, 0
      %v492 = vsel %vm457, %v375, 0
      %v495 = vsel %vm457, %v377, 0
      %v498 = vsel %vm457, %v379, 0
      %v501 = vsel %vm457, %v381, 0
      %v504 = vsel %vm457, %v383, 0
      %vm506 = vcmask 1040384
      %vm507 = vcmask 1041408
      %v508 = vsel %vm506, 4294967295, 65535
      %v509 = vsel %vm507, %v508, 0
      %v511 = vand.u32 %v447, %v509
      %513 = vmatprep.subr.bf16.mxu0 0
      %514 = vmatpush1.bf16.msra.mxu0 %v445
      %515 = vmatprep.subr.bf16.mxu0 0
      %516 = vmatpush1.bf16.msra.mxu0 %v444
      %517 = vmatprep.subr.bf16.mxu0 0
      %518 = vmatpush1.bf16.msra.mxu0 %v443
      %519 = vmatprep.subr.bf16.mxu0 0
      %520 = vmatpush1.bf16.msra.mxu0 %v442
      %521 = vmatprep.subr.bf16.mxu0 0
      %522 = vmatpush1.bf16.msra.mxu0 %v441
      %523 = vmatprep.subr.bf16.mxu0 0
      %524 = vmatpush1.bf16.msra.mxu0 %v440
      %525 = vmatprep.subr.bf16.mxu0 0
      %526 = vmatpush1.bf16.msra.mxu0 %v439
      %527 = vmatprep.subr.bf16.mxu0 0
      %528 = vmatpush1.bf16.msra.mxu0 %v438
      %529 = vmatprep.subr.bf16.mxu0 0
      %530 = vmatpush2.bf16.msra.mxu0 0
      %531 = vmatprep.subr.bf16.mxu0 0
      %532 = vmatpush2.bf16.msra.mxu0 0
      %533 = vmatprep.subr.bf16.mxu0 0
      %534 = vmatpush2.bf16.msra.mxu0 0
      %535 = vmatprep.subr.bf16.mxu0 0
      %536 = vmatpush2.bf16.msra.mxu0 0
      %537 = vmatprep.subr.bf16.mxu0 0
      %538 = vmatpush2.bf16.msra.mxu0 0
      %539 = vmatprep.subr.bf16.mxu0 0
      %540 = vmatpush2.bf16.msra.mxu0 0
      %541 = vmatprep.subr.bf16.mxu0 0
      %542 = vmatpush2.bf16.msra.mxu0 %v511
      %543 = vmatprep.subr.bf16.mxu0 0
      %544 = vmatpush2.bf16.msra.mxu0 %v446
      %545 = vmatprep.mubr.bf16.mxu0 %v459
      %546 = vmatmul.mubr.bf16.gmra.mxu0 %v352
      %v547 = vpop.f32.mrf.mxu0
      %v548 = vadd.f32 0.0, %v547
      %v549 = vpop.f32.mrf.mxu0
      %v550 = vpop.f32.mrf.mxu0
      %v551 = vadd.f32 0.0, %v550
      %v552 = vpop.f32.mrf.mxu0
      %553 = vmatprep.mubr.bf16.mxu0 %v462
      %554 = vmatmul.mubr.bf16.gmra.mxu0 %v354
      %v555 = vpop.f32.mrf.mxu0
      %v556 = vadd.f32 0.0, %v555
      %v557 = vpop.f32.mrf.mxu0
      %v558 = vpop.f32.mrf.mxu0
      %v559 = vadd.f32 0.0, %v558
      %v560 = vpop.f32.mrf.mxu0
      %561 = vmatprep.mubr.bf16.mxu0 %v465
      %562 = vmatmul.mubr.bf16.gmra.mxu0 %v356
      %v563 = vpop.f32.mrf.mxu0
      %v564 = vadd.f32 0.0, %v563
      %v565 = vpop.f32.mrf.mxu0
      %v566 = vpop.f32.mrf.mxu0
      %v567 = vadd.f32 0.0, %v566
      %v568 = vpop.f32.mrf.mxu0
      %569 = vmatprep.mubr.bf16.mxu0 %v468
      %570 = vmatmul.mubr.bf16.gmra.mxu0 %v358
      %v571 = vpop.f32.mrf.mxu0
      %v572 = vadd.f32 0.0, %v571
      %v573 = vpop.f32.mrf.mxu0
      %v574 = vpop.f32.mrf.mxu0
      %v575 = vadd.f32 0.0, %v574
      %v576 = vpop.f32.mrf.mxu0
      %577 = vmatprep.mubr.bf16.mxu0 %v471
      %578 = vmatmul.mubr.bf16.gmra.mxu0 %v360
      %v579 = vpop.f32.mrf.mxu0
      %v580 = vadd.f32 0.0, %v579
      %v581 = vpop.f32.mrf.mxu0
      %v582 = vpop.f32.mrf.mxu0
      %v583 = vadd.f32 0.0, %v582
      %v584 = vpop.f32.mrf.mxu0
      %585 = vmatprep.mubr.bf16.mxu0 %v474
      %586 = vmatmul.mubr.bf16.gmra.mxu0 %v362
      %v587 = vpop.f32.mrf.mxu0
      %v588 = vadd.f32 0.0, %v587
      %v589 = vpop.f32.mrf.mxu0
      %v590 = vpop.f32.mrf.mxu0
      %v591 = vadd.f32 0.0, %v590
      %v592 = vpop.f32.mrf.mxu0
      %593 = vmatprep.mubr.bf16.mxu0 %v477
      %594 = vmatmul.mubr.bf16.gmra.mxu0 %v364
      %v595 = vpop.f32.mrf.mxu0
      %v596 = vadd.f32 0.0, %v595
      %v597 = vpop.f32.mrf.mxu0
      %v598 = vpop.f32.mrf.mxu0
      %v599 = vadd.f32 0.0, %v598
      %v600 = vpop.f32.mrf.mxu0
      %601 = vmatprep.mubr.bf16.mxu0 %v480
      %602 = vmatmul.mubr.bf16.gmra.mxu0 %v366
      %v603 = vpop.f32.mrf.mxu0
      %v604 = vadd.f32 0.0, %v603
      %v605 = vpop.f32.mrf.mxu0
      %v606 = vpop.f32.mrf.mxu0
      %v607 = vadd.f32 0.0, %v606
      %v608 = vpop.f32.mrf.mxu0
      %609 = vmatprep.mubr.bf16.mxu0 %v483
      %610 = vmatmul.mubr.bf16.gmra.mxu0 %v368
      %v611 = vpop.f32.mrf.mxu0
      %v612 = vadd.f32 0.0, %v611
      %v613 = vpop.f32.mrf.mxu0
      %v614 = vpop.f32.mrf.mxu0
      %v615 = vadd.f32 0.0, %v614
      %v616 = vpop.f32.mrf.mxu0
      %617 = vmatprep.mubr.bf16.mxu0 %v486
      %618 = vmatmul.mubr.bf16.gmra.mxu0 %v370
      %v619 = vpop.f32.mrf.mxu0
      %v620 = vadd.f32 0.0, %v619
      %v621 = vpop.f32.mrf.mxu0
      %v622 = vpop.f32.mrf.mxu0
      %v623 = vadd.f32 0.0, %v622
      %v624 = vpop.f32.mrf.mxu0
      %625 = vmatprep.mubr.bf16.mxu0 %v489
      %626 = vmatmul.mubr.bf16.gmra.mxu0 %v372
      %v627 = vpop.f32.mrf.mxu0
      %v628 = vadd.f32 0.0, %v627
      %v629 = vpop.f32.mrf.mxu0
      %v630 = vpop.f32.mrf.mxu0
      %v631 = vadd.f32 0.0, %v630
      %v632 = vpop.f32.mrf.mxu0
      %633 = vmatprep.mubr.bf16.mxu0 %v492
      %634 = vmatmul.mubr.bf16.gmra.mxu0 %v374
      %v635 = vpop.f32.mrf.mxu0
      %v636 = vadd.f32 0.0, %v635
      %v637 = vpop.f32.mrf.mxu0
      %v638 = vpop.f32.mrf.mxu0
      %v639 = vadd.f32 0.0, %v638
      %v640 = vpop.f32.mrf.mxu0
      %641 = vmatprep.mubr.bf16.mxu0 %v495
      %642 = vmatmul.mubr.bf16.gmra.mxu0 %v376
      %v643 = vpop.f32.mrf.mxu0
      %v644 = vadd.f32 0.0, %v643
      %v645 = vpop.f32.mrf.mxu0
      %v646 = vpop.f32.mrf.mxu0
      %v647 = vadd.f32 0.0, %v646
      %v648 = vpop.f32.mrf.mxu0
      %649 = vmatprep.mubr.bf16.mxu0 %v498
      %650 = vmatmul.mubr.bf16.gmra.mxu0 %v378
      %v651 = vpop.f32.mrf.mxu0
      %v652 = vadd.f32 0.0, %v651
      %v653 = vpop.f32.mrf.mxu0
      %v654 = vpop.f32.mrf.mxu0
      %v655 = vadd.f32 0.0, %v654
      %v656 = vpop.f32.mrf.mxu0
      %657 = vmatprep.mubr.bf16.mxu0 %v501
      %658 = vmatmul.mubr.bf16.gmra.mxu0 %v380
      %v659 = vpop.f32.mrf.mxu0
      %v660 = vadd.f32 0.0, %v659
      %v661 = vpop.f32.mrf.mxu0
      %v662 = vpop.f32.mrf.mxu0
      %v663 = vadd.f32 0.0, %v662
      %v664 = vpop.f32.mrf.mxu0
      %665 = vmatprep.mubr.bf16.mxu0 %v504
      %666 = vmatmul.mubr.bf16.gmra.mxu0 %v382
      %v667 = vpop.f32.mrf.mxu0
      %v668 = vadd.f32 0.0, %v667
      %v669 = vpop.f32.mrf.mxu0
      %v670 = vpop.f32.mrf.mxu0
      %v671 = vadd.f32 0.0, %v670
      %v672 = vpop.f32.mrf.mxu0
      %673 = vdwg.mxu0
      %v674 = vld [vmem:[%s2] sm:$0x1]
      %v676 = vlaneseq
      %v677 = vshrl.u32 %v676, 7
      %v678 = vsub.s32 0, %v677
      %v679 = vrot.slane %v674, %v678
      %v681 = vmul.f32 %v548, %v679
      %v682 = vmul.f32 %v551, %v679
      %v683 = vmul.f32 %v556, %v679
      %v684 = vmul.f32 %v559, %v679
      %v685 = vmul.f32 %v564, %v679
      %v686 = vmul.f32 %v567, %v679
      %v687 = vmul.f32 %v572, %v679
      %v688 = vmul.f32 %v575, %v679
      %v689 = vmul.f32 %v580, %v679
      %v690 = vmul.f32 %v583, %v679
      %v691 = vmul.f32 %v588, %v679
      %v692 = vmul.f32 %v591, %v679
      %v693 = vmul.f32 %v596, %v679
      %v694 = vmul.f32 %v599, %v679
      %v695 = vmul.f32 %v604, %v679
      %v696 = vmul.f32 %v607, %v679
      %v697 = vmul.f32 %v612, %v679
      %v698 = vmul.f32 %v615, %v679
      %v699 = vmul.f32 %v620, %v679
      %v700 = vmul.f32 %v623, %v679
      %v701 = vmul.f32 %v628, %v679
      %v702 = vmul.f32 %v631, %v679
      %v703 = vmul.f32 %v636, %v679
      %v704 = vmul.f32 %v639, %v679
      %v705 = vmul.f32 %v644, %v679
      %v706 = vmul.f32 %v647, %v679
      %v707 = vmul.f32 %v652, %v679
      %v708 = vmul.f32 %v655, %v679
      %v709 = vmul.f32 %v660, %v679
      %v710 = vmul.f32 %v663, %v679
      %v711 = vmul.f32 %v668, %v679
      %v712 = vmul.f32 %v671, %v679
      %v713 = vld [vmem:[%s3] sm:$0x1]
      %v715 = vlaneseq
      %v716 = vshrl.u32 %v715, 7
      %v717 = vsub.s32 0, %v716
      %v718 = vrot.slane %v713, %v717
      %v720 = vadd.f32 %v681, %v718
      %v721 = vadd.f32 %v682, %v718
      %v722 = vadd.f32 %v683, %v718
      %v723 = vadd.f32 %v684, %v718
      %v724 = vadd.f32 %v685, %v718
      %v725 = vadd.f32 %v686, %v718
      %v726 = vadd.f32 %v687, %v718
      %v727 = vadd.f32 %v688, %v718
      %v728 = vadd.f32 %v689, %v718
      %v729 = vadd.f32 %v690, %v718
      %v730 = vadd.f32 %v691, %v718
      %v731 = vadd.f32 %v692, %v718
      %v732 = vadd.f32 %v693, %v718
      %v733 = vadd.f32 %v694, %v718
      %v734 = vadd.f32 %v695, %v718
      %v735 = vadd.f32 %v696, %v718
      %v736 = vadd.f32 %v697, %v718
      %v737 = vadd.f32 %v698, %v718
      %v738 = vadd.f32 %v699, %v718
      %v739 = vadd.f32 %v700, %v718
      %v740 = vadd.f32 %v701, %v718
      %v741 = vadd.f32 %v702, %v718
      %v742 = vadd.f32 %v703, %v718
      %v743 = vadd.f32 %v704, %v718
      %v744 = vadd.f32 %v705, %v718
      %v745 = vadd.f32 %v706, %v718
      %v746 = vadd.f32 %v707, %v718
      %v747 = vadd.f32 %v708, %v718
      %v748 = vadd.f32 %v709, %v718
      %v749 = vadd.f32 %v710, %v718
      %v750 = vadd.f32 %v711, %v718
      %v751 = vadd.f32 %v712, %v718
      %v752 = vmax.f32 %v720, 0.0
      %v753 = vmax.f32 %v721, 0.0
      %v754 = vmax.f32 %v722, 0.0
      %v755 = vmax.f32 %v723, 0.0
      %v756 = vmax.f32 %v724, 0.0
      %v757 = vmax.f32 %v725, 0.0
      %v758 = vmax.f32 %v726, 0.0
      %v759 = vmax.f32 %v727, 0.0
      %v760 = vmax.f32 %v728, 0.0
      %v761 = vmax.f32 %v729, 0.0
      %v762 = vmax.f32 %v730, 0.0
      %v763 = vmax.f32 %v731, 0.0
      %v764 = vmax.f32 %v732, 0.0
      %v765 = vmax.f32 %v733, 0.0
      %v766 = vmax.f32 %v734, 0.0
      %v767 = vmax.f32 %v735, 0.0
      %v768 = vmax.f32 %v736, 0.0
      %v769 = vmax.f32 %v737, 0.0
      %v770 = vmax.f32 %v738, 0.0
      %v771 = vmax.f32 %v739, 0.0
      %v772 = vmax.f32 %v740, 0.0
      %v773 = vmax.f32 %v741, 0.0
      %v774 = vmax.f32 %v742, 0.0
      %v775 = vmax.f32 %v743, 0.0
      %v776 = vmax.f32 %v744, 0.0
      %v777 = vmax.f32 %v745, 0.0
      %v778 = vmax.f32 %v746, 0.0
      %v779 = vmax.f32 %v747, 0.0
      %v780 = vmax.f32 %v748, 0.0
      %v781 = vmax.f32 %v749, 0.0
      %v782 = vmax.f32 %v750, 0.0
      %v783 = vmax.f32 %v751, 0.0
      %v784 = vpack.c.bf16 %v753, %v752
      %v785 = vpack.c.bf16 %v755, %v754
      %v786 = vpack.c.bf16 %v757, %v756
      %v787 = vpack.c.bf16 %v759, %v758
      %v788 = vpack.c.bf16 %v761, %v760
      %v789 = vpack.c.bf16 %v763, %v762
      %v790 = vpack.c.bf16 %v765, %v764
      %v791 = vpack.c.bf16 %v767, %v766
      %v792 = vpack.c.bf16 %v769, %v768
      %v793 = vpack.c.bf16 %v771, %v770
      %v794 = vpack.c.bf16 %v773, %v772
      %v795 = vpack.c.bf16 %v775, %v774
      %v796 = vpack.c.bf16 %v777, %v776
      %v797 = vpack.c.bf16 %v779, %v778
      %v798 = vpack.c.bf16 %v781, %v780
      %v799 = vpack.c.bf16 %v783, %v782
      %v816 = vunpack.c.l.b16 %v784
      %v817 = vunpack.c.h.b16 %v784
      %v818 = vunpack.c.l.b16 %v785
      %v819 = vunpack.c.h.b16 %v785
      %v820 = vunpack.c.l.b16 %v786
      %v821 = vunpack.c.h.b16 %v786
      %v822 = vunpack.c.l.b16 %v787
      %v823 = vunpack.c.h.b16 %v787
      %v824 = vunpack.c.l.b16 %v788
      %v825 = vunpack.c.h.b16 %v788
      %v826 = vunpack.c.l.b16 %v789
      %v827 = vunpack.c.h.b16 %v789
      %v828 = vunpack.c.l.b16 %v790
      %v829 = vunpack.c.h.b16 %v790
      %v830 = vunpack.c.l.b16 %v791
      %v831 = vunpack.c.h.b16 %v791
      %v832 = vunpack.c.l.b16 %v792
      %v833 = vunpack.c.h.b16 %v792
      %v834 = vunpack.c.l.b16 %v793
      %v835 = vunpack.c.h.b16 %v793
      %v836 = vunpack.c.l.b16 %v794
      %v837 = vunpack.c.h.b16 %v794
      %v838 = vunpack.c.l.b16 %v795
      %v839 = vunpack.c.h.b16 %v795
      %v840 = vunpack.c.l.b16 %v796
      %v841 = vunpack.c.h.b16 %v796
      %v842 = vunpack.c.l.b16 %v797
      %v843 = vunpack.c.h.b16 %v797
      %v844 = vunpack.c.l.b16 %v798
      %v845 = vunpack.c.h.b16 %v798
      %v846 = vunpack.c.l.b16 %v799
      %v847 = vunpack.c.h.b16 %v799
      %v848 = vpack.c.b16 %v816, %v816
      %v849 = vpack.c.b16 %v817, %v817
      %v850 = vpack.c.b16 %v818, %v818
      %v851 = vpack.c.b16 %v819, %v819
      %v852 = vpack.c.b16 %v820, %v820
      %v853 = vpack.c.b16 %v821, %v821
      %v854 = vpack.c.b16 %v822, %v822
      %v855 = vpack.c.b16 %v823, %v823
      %v856 = vpack.c.b16 %v824, %v824
      %v857 = vpack.c.b16 %v825, %v825
      %v858 = vpack.c.b16 %v826, %v826
      %v859 = vpack.c.b16 %v827, %v827
      %v860 = vpack.c.b16 %v828, %v828
      %v861 = vpack.c.b16 %v829, %v829
      %v862 = vpack.c.b16 %v830, %v830
      %v863 = vpack.c.b16 %v831, %v831
      %v864 = vpack.c.b16 %v832, %v832
      %v865 = vpack.c.b16 %v833, %v833
      %v866 = vpack.c.b16 %v834, %v834
      %v867 = vpack.c.b16 %v835, %v835
      %v868 = vpack.c.b16 %v836, %v836
      %v869 = vpack.c.b16 %v837, %v837
      %v870 = vpack.c.b16 %v838, %v838
      %v871 = vpack.c.b16 %v839, %v839
      %v872 = vpack.c.b16 %v840, %v840
      %v873 = vpack.c.b16 %v841, %v841
      %v874 = vpack.c.b16 %v842, %v842
      %v875 = vpack.c.b16 %v843, %v843
      %v876 = vpack.c.b16 %v844, %v844
      %v877 = vpack.c.b16 %v845, %v845
      %v878 = vpack.c.b16 %v846, %v846
      %v879 = vpack.c.b16 %v847, %v847
      %vm912 = vcmask 60416
      %913 = vst.msk [vmem:[%s202] sm:$0xf] %vm912, %v848
      %914 = vst.msk [vmem:[%s202 + $0x4] sm:$0xf] %vm912, %v849
      %915 = vst.msk [vmem:[%s202 + $0x8] sm:$0xf] %vm912, %v850
      %916 = vst.msk [vmem:[%s202 + $0xc] sm:$0xf] %vm912, %v851
      %917 = vst.msk [vmem:[%s202 + $0x10] sm:$0xf] %vm912, %v852
      %918 = vst.msk [vmem:[%s202 + $0x14] sm:$0xf] %vm912, %v853
      %919 = vst.msk [vmem:[%s202 + $0x18] sm:$0xf] %vm912, %v854
      %920 = vst.msk [vmem:[%s202 + $0x1c] sm:$0xf] %vm912, %v855
      %921 = vst.msk [vmem:[%s202 + $0x20] sm:$0xf] %vm912, %v856
      %922 = vst.msk [vmem:[%s202 + $0x24] sm:$0xf] %vm912, %v857
      %923 = vst.msk [vmem:[%s202 + $0x28] sm:$0xf] %vm912, %v858
      %924 = vst.msk [vmem:[%s202 + $0x2c] sm:$0xf] %vm912, %v859
      %925 = vst.msk [vmem:[%s202 + $0x30] sm:$0xf] %vm912, %v860
      %926 = vst.msk [vmem:[%s202 + $0x34] sm:$0xf] %vm912, %v861
      %927 = vst.msk [vmem:[%s202 + $0x38] sm:$0xf] %vm912, %v862
      %928 = vst.msk [vmem:[%s202 + $0x3c] sm:$0xf] %vm912, %v863
      %929 = vst.msk [vmem:[%s202 + $0x40] sm:$0xf] %vm912, %v864
      %930 = vst.msk [vmem:[%s202 + $0x44] sm:$0xf] %vm912, %v865
      %931 = vst.msk [vmem:[%s202 + $0x48] sm:$0xf] %vm912, %v866
      %932 = vst.msk [vmem:[%s202 + $0x4c] sm:$0xf] %vm912, %v867
      %933 = vst.msk [vmem:[%s202 + $0x50] sm:$0xf] %vm912, %v868
      %934 = vst.msk [vmem:[%s202 + $0x54] sm:$0xf] %vm912, %v869
      %935 = vst.msk [vmem:[%s202 + $0x58] sm:$0xf] %vm912, %v870
      %936 = vst.msk [vmem:[%s202 + $0x5c] sm:$0xf] %vm912, %v871
      %937 = vst.msk [vmem:[%s202 + $0x60] sm:$0xf] %vm912, %v872
      %938 = vst.msk [vmem:[%s202 + $0x64] sm:$0xf] %vm912, %v873
      %939 = vst.msk [vmem:[%s202 + $0x68] sm:$0xf] %vm912, %v874
      %940 = vst.msk [vmem:[%s202 + $0x6c] sm:$0xf] %vm912, %v875
      %941 = vst.msk [vmem:[%s202 + $0x70] sm:$0xf] %vm912, %v876
      %942 = vst.msk [vmem:[%s202 + $0x74] sm:$0xf] %vm912, %v877
      %943 = vst.msk [vmem:[%s202 + $0x78] sm:$0xf] %vm912, %v878
      %944 = vst.msk [vmem:[%s202 + $0x7c] sm:$0xf] %vm912, %v879
      %s945 = smul.u32 32, %s15
      %p946 = scmp.lt.s32.totalorder %s945, 255
      %s947 = scalar_select %p946, %s945, 255
      %s948 = smul.addr %s947, 4
      %s949 = scalar_lea.vmem %s4, %s948
      // Predicated region
      $region37: #{tpu_custom_call.1} parent=35 // pred_check
        %p950 = pneg %p122
      $region38: #{tpu_custom_call.1} parent=35 // pred_check_branch
        %952 = sbr.rel (%p950) target = $region40
      $region39: #{tpu_custom_call.1} parent=35 // pred_region
        %s953 = smul.u32 32, %s15
      $region40: #{tpu_custom_call.1} parent=35 // pred_fallthru
        _
    $region36: #{tpu_custom_call.1} parent=5 // pred_fallthru
      _
    %p954 = scmp.le.s32.totalorder 2, %s10
    // Predicated region
    $region41: #{tpu_custom_call.1} parent=5 // pred_check
      %p955 = pneg %p954
    $region42: #{tpu_custom_call.1} parent=5 // pred_check_branch
      %957 = sbr.rel (%p955) target = $region44
    $region43: #{tpu_custom_call.1} parent=5 // pred_region
      %s958 = ssub.s32 %s10, 2
      // Predicated region
      $region45: #{tpu_custom_call.1} parent=43 // pred_check
        %p959 = pneg %p128
      $region46: #{tpu_custom_call.1} parent=43 // pred_check_branch
        %961 = sbr.rel (%p959) target = $region48
      $region47: #{tpu_custom_call.1} parent=43 // pred_region
        %s962 = smul.u32 32, %s16
        %p963 = scmp.lt.s32.totalorder %s962, 255
        %s964 = scalar_select %p963, %s962, 255
        %s965 = smul.addr %s964, 4
        %s966 = scalar_lea.vmem %s4, %s965
      $region48: #{tpu_custom_call.1} parent=43 // pred_fallthru
        _
    $region44: #{tpu_custom_call.1} parent=5 // pred_fallthru
      _
  $region6: #{tpu_custom_call.1} parent=0 // loop_footer
    %s14 = sadd.s32 1, %s10
  $region7: #{tpu_custom_call.1} parent=0 // loop_footer_branch
    %9 = sbr.rel target = $region3
  $region8: #{tpu_custom_call.1} parent=0 // loop_exit
    _

</llo_original>
